<compile_context>
chip_gen: v5e
topology: v5e:2x2
jax: 0.10.0
libtpu: 0.0.40
codegen_flags: <defaults>
</compile_context>

<pallas_src>
import jax
import jax.numpy as jnp
import numpy as np
from jax.experimental import pallas as pl
from jax.experimental.pallas import tpu as pltpu


def _energy_logits_kernel(enc_ref, hb_ref, we_ref, v_ref, out_ref):
    """One block of rows r=(s,b) of the flattened [S*B, De] encoder tensor.

    enc_ref: [tR, De]  streamed encoder rows (double-buffered by the pipeline)
    hb_ref:  [tR, Dd]  resident: (hidden @ Wh^T + bias) replicated to row pattern
    we_ref:  [De, Dd]  resident bf16 encoder-side weight
    v_ref:   [1, Dd]   resident f32 v-projection row
    out_ref: [tR, 1]   raw attention logit per (s, b) row
    """
    e = enc_ref[...].astype(jnp.bfloat16)  # bf16 into the MXU, f32 accumulate
    ew = jnp.dot(e, we_ref[...], preferred_element_type=jnp.float32)  # [tR, Dd]
    energy = jnp.tanh(ew + hb_ref[...])    # bias already folded into hb (f32 VPU/EUP)
    # v-projection as VPU multiply + lane reduce (avoids a wasteful N=1 MXU matmul)
    logits = jnp.sum(energy * v_ref[...], axis=1, keepdims=True)      # [tR, 1]
    out_ref[...] = logits.astype(out_ref.dtype)


def _softmax_kernel(x_ref, o_ref):
    """Row softmax over the last (lane) axis of a [tB, S] logits block."""
    x = x_ref[...]
    m = jnp.max(x, axis=1, keepdims=True)
    p = jnp.exp(x - m)
    denom = jnp.sum(p, axis=1, keepdims=True)
    o_ref[...] = (p * pl.reciprocal(denom, approx=True)).astype(o_ref.dtype)


def _pick_src_block(S, B, max_rows):
    """Largest divisor ts of S with ts*B <= max_rows and (ts*B) % 8 == 0.

    Falls back to ts = S (single full-extent block), which is always a legal
    block shape.
    """
    good = [d for d in range(1, S + 1)
            if S % d == 0 and d * B <= max_rows and (d * B) % 8 == 0]
    return max(good) if good else S


def attention_forward(hidden, encoder_outputs, w_attn, b_attn, w_v,
                      *, max_block_rows=1024):
    """hidden: [B, Dd]; encoder_outputs: [S, B, De] (PyTorch convention).

    w_attn: [Dd, De+Dd] (nn.Linear weight, hidden columns first), b_attn: [Dd],
    w_v: [1, Dd].  Returns softmax attention weights [B, S] (f32).

    max_block_rows bounds the streamed enc tile (rows of [S*B, De]); the
    default keeps the double-buffered footprint well inside v7x's 64 MiB VMEM
    even at De = Dd = 1024.
    """
    S, B, De = encoder_outputs.shape
    Dd = hidden.shape[-1]
    R = S * B

    # Split-weight form of Linear(cat(hidden, enc)); cat order is (hidden, enc),
    # so the first Dd input columns of w_attn act on hidden.
    wh = w_attn[:, :Dd]                              # [Dd, Dd]
    we = jnp.transpose(w_attn[:, Dd:])               # [De, Dd]

    # Hidden-side projection + bias: tiny (O(B*Dd^2)), computed once in f32.
    hb = (hidden.astype(jnp.float32) @ jnp.transpose(wh).astype(jnp.float32)
          + b_attn.astype(jnp.float32))              # [B, Dd]

    ts = _pick_src_block(S, B, max_block_rows)       # src positions per block
    tr = ts * B                                      # rows per block
    n_blocks = R // tr

    # Free contiguous collapse — NO transpose of the big tensor in HBM.
    enc2d = encoder_outputs.reshape(R, De)
    # Row r of enc2d is (s = r // B, b = r % B); replicate hb to that pattern
    # for one block (identical for every block since blocks start at s-boundaries).
    hb_tile = jnp.tile(hb, (ts, 1))                  # [tr, Dd] f32, stays resident
    we_bf = we.astype(jnp.bfloat16)                  # [De, Dd] bf16, stays resident
    v_row = w_v.reshape(1, Dd).astype(jnp.float32)   # [1, Dd]  f32, stays resident

    logits_col = pl.pallas_call(
        _energy_logits_kernel,
        out_shape=jax.ShapeDtypeStruct((R, 1), jnp.float32),
        grid=(n_blocks,),
        in_specs=[
            pl.BlockSpec((tr, De), lambda i: (i, 0)),   # streamed enc tile
            pl.BlockSpec((tr, Dd), lambda i: (0, 0)),   # resident hidden proj
            pl.BlockSpec((De, Dd), lambda i: (0, 0)),   # resident We (bf16)
            pl.BlockSpec((1, Dd), lambda i: (0, 0)),    # resident v row
        ],
        out_specs=pl.BlockSpec((tr, 1), lambda i: (i, 0)),
        compiler_params=pltpu.CompilerParams(
            dimension_semantics=("parallel",),          # row blocks independent (megacore-friendly)
            vmem_limit_bytes=48 * 1024 * 1024,          # explicit, with headroom on v7x's 64 MiB
        ),
    )(enc2d, hb_tile, we_bf, v_row)

    # Only the tiny [S, B] logits tensor is reshaped/transposed on the host.
    logits = jnp.transpose(logits_col.reshape(S, B))    # [B, S]

    # Softmax over src_len (last/lane axis), tiled over batch rows.
    tb = B
    for cand in (256, 128, 64, 32, 16, 8):
        if B % cand == 0:
            tb = cand
            break
    probs = pl.pallas_call(
        _softmax_kernel,
        out_shape=jax.ShapeDtypeStruct((B, S), jnp.float32),
        grid=(B // tb,),
        in_specs=[pl.BlockSpec((tb, S), lambda i: (i, 0))],
        out_specs=pl.BlockSpec((tb, S), lambda i: (i, 0)),
        compiler_params=pltpu.CompilerParams(dimension_semantics=("parallel",)),
    )(logits)
    return probs


def attention_reference(hidden, encoder_outputs, w_attn, b_attn, w_v):
    """Pure-JAX f32 mirror of the PyTorch forward, for verification."""
    S, B, De = encoder_outputs.shape
    hidden_rep = jnp.repeat(hidden[:, None, :], S, axis=1)          # [B, S, Dd]
    enc = jnp.transpose(encoder_outputs, (1, 0, 2))                 # [B, S, De]
    energy = jnp.concatenate([hidden_rep, enc], axis=2)             # [B, S, Dd+De]
    energy = jnp.tanh(energy @ w_attn.T + b_attn)                   # [B, S, Dd]
    attention = (energy @ w_v.T)[..., 0]                            # [B, S]
    return jax.nn.softmax(attention, axis=1)


if __name__ == "__main__":
    B, S, enc_hid, dec_hid = 4, 16, 32, 32

    key = jax.random.PRNGKey(0)
    k_h, k_e, k_w, k_b, k_v = jax.random.split(key, 5)

    hidden = jax.random.normal(k_h, (B, dec_hid), dtype=jnp.float32)
    encoder_outputs = jax.random.normal(k_e, (S, B, enc_hid), dtype=jnp.float32)

    # Deterministic parameter init mimicking nn.Linear's uniform(-1/sqrt(fan_in), ...)
    fan_attn = enc_hid + dec_hid
    bound_attn = 1.0 / np.sqrt(fan_attn)
    w_attn = jax.random.uniform(k_w, (dec_hid, fan_attn), jnp.float32,
                                -bound_attn, bound_attn)
    b_attn = jax.random.uniform(k_b, (dec_hid,), jnp.float32,
                                -bound_attn, bound_attn)
    bound_v = 1.0 / np.sqrt(dec_hid)
    w_v = jax.random.uniform(k_v, (1, dec_hid), jnp.float32, -bound_v, bound_v)

    # max_block_rows=32 forces a 2-step grid at these small shapes so the
    # multi-block pipelined path is actually exercised.
    out = attention_forward(hidden, encoder_outputs, w_attn, b_attn, w_v,
                            max_block_rows=32)
    out = jax.block_until_ready(out)

    ref = attention_reference(hidden, encoder_outputs, w_attn, b_attn, w_v)
    assert out.shape == (B, S)
    # Tolerances loosened slightly vs pure-f32: bf16 MXU inputs (f32 accumulate)
    # and approx-EUP reciprocal in the softmax normalizer.
    np.testing.assert_allclose(np.asarray(out), np.asarray(ref), rtol=2e-2, atol=5e-3)
    np.testing.assert_allclose(np.asarray(out).sum(axis=1), np.ones(B), rtol=0, atol=5e-3)

    print("KERNEL_OK")
</pallas_src>

<mosaic_0001>
module attributes {stable_mosaic.version = 11 : i64} {
  func.func @_energy_logits_kernel(%arg0: i32, %arg1: memref<32x32xf32, #tpu.memory_space<vmem>>, %arg2: memref<32x32xf32, #tpu.memory_space<vmem>>, %arg3: memref<32x32xbf16, #tpu.memory_space<vmem>>, %arg4: memref<1x32xf32, #tpu.memory_space<vmem>>, %arg5: memref<32x1xf32, #tpu.memory_space<vmem>>) attributes {dimension_semantics = [#tpu.dimension_semantics<parallel>], iteration_bounds = array<i64: 2>, scalar_prefetch = 0 : i64, scratch_operands = 0 : i64, tpu.core_type = #tpu.core_type<tc>, window_params = [{transform_indices = @transform_0, window_bounds = array<i64: 32, 32>}, {pipeline_mode = #tpu.pipeline_mode<synchronous>, transform_indices = @transform_1, window_bounds = array<i64: 32, 32>}, {pipeline_mode = #tpu.pipeline_mode<synchronous>, transform_indices = @transform_2, window_bounds = array<i64: 32, 32>}, {pipeline_mode = #tpu.pipeline_mode<synchronous>, transform_indices = @transform_3, window_bounds = array<i64: 1, 32>}, {transform_indices = @transform_4, window_bounds = array<i64: 32, 1>}]} {
    %c0 = arith.constant 0 : index
    %c0_0 = arith.constant 0 : index
    %0 = vector.load %arg1[%c0, %c0_0] : memref<32x32xf32, #tpu.memory_space<vmem>>, vector<32x32xf32>
    %1 = arith.truncf %0 : vector<32x32xf32> to vector<32x32xbf16>
    %c0_1 = arith.constant 0 : index
    %c0_2 = arith.constant 0 : index
    %2 = vector.load %arg3[%c0_1, %c0_2] : memref<32x32xbf16, #tpu.memory_space<vmem>>, vector<32x32xbf16>
    %cst = arith.constant dense<0.000000e+00> : vector<32x32xf32>
    %3 = tpu.matmul %1, %2, %cst {dimension_numbers = #tpu.dot_dimension_numbers<[1], [0], [0], [1], [0, 0, 1, 1], [], []>} : vector<32x32xbf16>, vector<32x32xbf16>, vector<32x32xf32> -> vector<32x32xf32>
    %c0_3 = arith.constant 0 : index
    %c0_4 = arith.constant 0 : index
    %4 = vector.load %arg2[%c0_3, %c0_4] : memref<32x32xf32, #tpu.memory_space<vmem>>, vector<32x32xf32>
    %5 = arith.addf %3, %4 : vector<32x32xf32>
    %6 = math.tanh %5 : vector<32x32xf32>
    %c0_5 = arith.constant 0 : index
    %c0_6 = arith.constant 0 : index
    %7 = vector.load %arg4[%c0_5, %c0_6] : memref<1x32xf32, #tpu.memory_space<vmem>>, vector<1x32xf32>
    %8 = vector.broadcast %7 : vector<1x32xf32> to vector<32x32xf32>
    %9 = arith.mulf %6, %8 : vector<32x32xf32>
    %cst_7 = arith.constant dense<0.000000e+00> : vector<32xf32>
    %10 = vector.multi_reduction <add>, %9, %cst_7 [1] : vector<32x32xf32> to vector<32xf32>
    %11 = vector.shape_cast %10 : vector<32xf32> to vector<32x1xf32>
    %c0_8 = arith.constant 0 : index
    %c0_9 = arith.constant 0 : index
    %12 = vector.load %arg5[%c0_8, %c0_9] : memref<32x1xf32, #tpu.memory_space<vmem>>, vector<32x1xf32>
    tpu.vector_store %arg5[%c0_8, %c0_9], %11 {strides = array<i32>} : memref<32x1xf32, #tpu.memory_space<vmem>>, vector<32x1xf32>,
    return
  }
  func.func @transform_0(%arg0: i32) -> (i32, i32) {
    %c0_i32 = arith.constant 0 : i32
    %c0_i32_0 = arith.constant 0 : i32
    return %arg0, %c0_i32 : i32, i32
  }
  func.func @transform_1(%arg0: i32) -> (i32, i32) {
    %c0_i32 = arith.constant 0 : i32
    %c0_i32_0 = arith.constant 0 : i32
    %c0_i32_1 = arith.constant 0 : i32
    return %c0_i32, %c0_i32_0 : i32, i32
  }
  func.func @transform_2(%arg0: i32) -> (i32, i32) {
    %c0_i32 = arith.constant 0 : i32
    %c0_i32_0 = arith.constant 0 : i32
    %c0_i32_1 = arith.constant 0 : i32
    return %c0_i32, %c0_i32_0 : i32, i32
  }
  func.func @transform_3(%arg0: i32) -> (i32, i32) {
    %c0_i32 = arith.constant 0 : i32
    %c0_i32_0 = arith.constant 0 : i32
    %c0_i32_1 = arith.constant 0 : i32
    return %c0_i32, %c0_i32_0 : i32, i32
  }
  func.func @transform_4(%arg0: i32) -> (i32, i32) {
    %c0_i32 = arith.constant 0 : i32
    %c0_i32_0 = arith.constant 0 : i32
    return %arg0, %c0_i32 : i32, i32
  }
}

</mosaic_0001>

<llo_original>
// kernel: tpu_custom_call.1
$region0: #{tpu_custom_call.1}
  #allocation0 [shape = 'u32[]', space=smem, size = 0x4, offset = 0x4, fixed_abs, tag = 'smem constant byte address 0x4 - core index']
  #allocation1 [shape = 'u32[72,128]{1,0:T(1,128)}', space=vmem, size = 0x9000, scoped, tag = 'internal scratch']
  %s0 = inlined_call_operand.vmem [shape: f32[64,32], index: 0, kind: input, shape index: {}]
  %s1 = inlined_call_operand.vmem [shape: f32[32,32], index: 1, kind: input, shape index: {}]
  %s2 = inlined_call_operand.vmem [shape: bf16[32,32], index: 2, kind: input, shape index: {}]
  %s3 = inlined_call_operand.vmem [shape: f32[1,32], index: 3, kind: input, shape index: {}]
  %s4 = inlined_call_operand.vmem [shape: f32[64,1], index: 4, kind: output, shape index: {}]
  %s5 = sld [smem:[#allocation0]]
  $region49: #{tpu_custom_call.1} parent=0
    _
  %s7 = ssub.s32 1, %s5
  %s8 = scalar_select 0, %s7, %s5
  loop: start=0, step=1, limit=4
  $region2: #{tpu_custom_call.1} parent=0 // loop_pre_header
    _
  $region3: #{tpu_custom_call.1} parent=0 // loop_header
    %s10 = sphi 0, %s14
    %p11 = scmp.ge.s32.totalorder %s10, 4
    %s20 = sphi 0, %s22
    %s23 = sphi 0, %s20
    %s24 = sphi 0, %s23
    %s40 = sphi 0, %s24
    %s44 = sphi 0, %s44
    %s46 = sphi 0, %s44
    %s47 = sphi 0, %s46
    %s61 = sphi 0, %s47
    %s65 = sphi 0, %s65
    %s67 = sphi 0, %s65
    %s68 = sphi 0, %s67
    %s82 = sphi 0, %s68
    %s86 = sphi 0, %s86
    %s88 = sphi 0, %s86
    %s89 = sphi 0, %s88
    %s103 = sphi 0, %s89
    %s109 = sphi 0, %s111
    %s112 = sphi 0, %s109
    %s113 = sphi 0, %s112
    %s129 = sphi 0, %s113
  $region4: #{tpu_custom_call.1} parent=0 // loop_header_branch
    %13 = sbr.rel (%p11) target = $region8
  $region5: #{tpu_custom_call.1} parent=0 // loop_body
    %s15 = ssub.s32 %s10, 1
    %s16 = ssub.s32 %s10, 2
    %s17 = sadd.s32 %s10, 1
    %s18 = ssub.s32 %s10, %s17
    %p19 = scmp.eq.s32.totalorder %s18, 0
    %s21 = sadd.s32 %s20, 1
    %s22 = scalar_select %p19, %s20, %s21
    %p25 = pneg %p19
    %p26 = scmp.eq.s32.totalorder %s10, 1
    %p27 = por %p25, %p26
    %p28 = scmp.ne.s32.totalorder %s20, %s23
    %p29 = scmp.eq.s32.totalorder %s10, 0
    %p30 = por %p28, %p29
    %p31 = scmp.ne.s32.totalorder %s20, %s23
    %p32 = scmp.eq.s32.totalorder %s15, 1
    %p33 = por %p31, %p32
    %p34 = scmp.ne.s32.totalorder %s23, %s24
    %p35 = scmp.eq.s32.totalorder %s15, 0
    %p36 = por %p34, %p35
    %p37 = scmp.ne.s32.totalorder %s23, %s24
    %p38 = scmp.eq.s32.totalorder %s16, 1
    %p39 = por %p37, %p38
    %p41 = scmp.ne.s32.totalorder %s24, %s40
    %p42 = scmp.eq.s32.totalorder %s16, 0
    %p43 = por %p41, %p42
    %s45 = sadd.s32 %s44, 1
    %p48 = scmp.eq.s32.totalorder %s10, 1
    %p49 = scmp.ne.s32.totalorder %s44, %s46
    %p50 = scmp.eq.s32.totalorder %s10, 0
    %p51 = por %p49, %p50
    %p52 = scmp.ne.s32.totalorder %s44, %s46
    %p53 = scmp.eq.s32.totalorder %s15, 1
    %p54 = por %p52, %p53
    %p55 = scmp.ne.s32.totalorder %s46, %s47
    %p56 = scmp.eq.s32.totalorder %s15, 0
    %p57 = por %p55, %p56
    %p58 = scmp.ne.s32.totalorder %s46, %s47
    %p59 = scmp.eq.s32.totalorder %s16, 1
    %p60 = por %p58, %p59
    %p62 = scmp.ne.s32.totalorder %s47, %s61
    %p63 = scmp.eq.s32.totalorder %s16, 0
    %p64 = por %p62, %p63
    %s66 = sadd.s32 %s65, 1
    %p69 = scmp.eq.s32.totalorder %s10, 1
    %p70 = scmp.ne.s32.totalorder %s65, %s67
    %p71 = scmp.eq.s32.totalorder %s10, 0
    %p72 = por %p70, %p71
    %p73 = scmp.ne.s32.totalorder %s65, %s67
    %p74 = scmp.eq.s32.totalorder %s15, 1
    %p75 = por %p73, %p74
    %p76 = scmp.ne.s32.totalorder %s67, %s68
    %p77 = scmp.eq.s32.totalorder %s15, 0
    %p78 = por %p76, %p77
    %p79 = scmp.ne.s32.totalorder %s67, %s68
    %p80 = scmp.eq.s32.totalorder %s16, 1
    %p81 = por %p79, %p80
    %p83 = scmp.ne.s32.totalorder %s68, %s82
    %p84 = scmp.eq.s32.totalorder %s16, 0
    %p85 = por %p83, %p84
    %s87 = sadd.s32 %s86, 1
    %p90 = scmp.eq.s32.totalorder %s10, 1
    %p91 = scmp.ne.s32.totalorder %s86, %s88
    %p92 = scmp.eq.s32.totalorder %s10, 0
    %p93 = por %p91, %p92
    %p94 = scmp.ne.s32.totalorder %s86, %s88
    %p95 = scmp.eq.s32.totalorder %s15, 1
    %p96 = por %p94, %p95
    %p97 = scmp.ne.s32.totalorder %s88, %s89
    %p98 = scmp.eq.s32.totalorder %s15, 0
    %p99 = por %p97, %p98
    %p100 = scmp.ne.s32.totalorder %s88, %s89
    %p101 = scmp.eq.s32.totalorder %s16, 1
    %p102 = por %p100, %p101
    %p104 = scmp.ne.s32.totalorder %s89, %s103
    %p105 = scmp.eq.s32.totalorder %s16, 0
    %p106 = por %p104, %p105
    %s107 = ssub.s32 %s10, %s17
    %p108 = scmp.eq.s32.totalorder %s107, 0
    %s110 = sadd.s32 %s109, 1
    %s111 = scalar_select %p108, %s109, %s110
    %p114 = pneg %p108
    %p115 = scmp.eq.s32.totalorder %s10, 1
    %p116 = por %p114, %p115
    %p117 = scmp.ne.s32.totalorder %s109, %s112
    %p118 = scmp.eq.s32.totalorder %s10, 0
    %p119 = por %p117, %p118
    %p120 = scmp.ne.s32.totalorder %s109, %s112
    %p121 = scmp.eq.s32.totalorder %s15, 1
    %p122 = por %p120, %p121
    %p123 = scmp.ne.s32.totalorder %s112, %s113
    %p124 = scmp.eq.s32.totalorder %s15, 0
    %p125 = por %p123, %p124
    %p126 = scmp.ne.s32.totalorder %s112, %s113
    %p127 = scmp.eq.s32.totalorder %s16, 1
    %p128 = por %p126, %p127
    %p130 = scmp.ne.s32.totalorder %s113, %s129
    %p131 = scmp.eq.s32.totalorder %s16, 0
    %p132 = por %p130, %p131
    %p133 = scmp.le.s32.totalorder 1, %s10
    %p134 = scmp.lt.s32.totalorder %s10, 3
    %p135 = pnand %p133, %p134
    %p136 = pneg %p135
    // Predicated region
    $region9: #{tpu_custom_call.1} parent=5 // pred_check
      _
    $region10: #{tpu_custom_call.1} parent=5 // pred_check_branch
      %138 = sbr.rel (%p135) target = $region12
    $region11: #{tpu_custom_call.1} parent=5 // pred_region
      %s139 = ssub.s32 %s10, 1
      // Predicated region
      $region13: #{tpu_custom_call.1} parent=11 // pred_check
        %p140 = pneg %p57
      $region14: #{tpu_custom_call.1} parent=11 // pred_check_branch
        %142 = sbr.rel (%p140) target = $region16
      $region15: #{tpu_custom_call.1} parent=11 // pred_region
        _
      $region16: #{tpu_custom_call.1} parent=11 // pred_fallthru
        _
      // Predicated region
      $region17: #{tpu_custom_call.1} parent=11 // pred_check
        %p143 = pneg %p78
      $region18: #{tpu_custom_call.1} parent=11 // pred_check_branch
        %145 = sbr.rel (%p143) target = $region20
      $region19: #{tpu_custom_call.1} parent=11 // pred_region
        _
      $region20: #{tpu_custom_call.1} parent=11 // pred_fallthru
        _
      // Predicated region
      $region21: #{tpu_custom_call.1} parent=11 // pred_check
        %p146 = pneg %p99
      $region22: #{tpu_custom_call.1} parent=11 // pred_check_branch
        %148 = sbr.rel (%p146) target = $region24
      $region23: #{tpu_custom_call.1} parent=11 // pred_region
        _
      $region24: #{tpu_custom_call.1} parent=11 // pred_fallthru
        _
    $region12: #{tpu_custom_call.1} parent=5 // pred_fallthru
      _
    %p149 = scmp.lt.s32.totalorder %s10, 2
    // Predicated region
    $region25: #{tpu_custom_call.1} parent=5 // pred_check
      %p150 = pneg %p149
    $region26: #{tpu_custom_call.1} parent=5 // pred_check_branch
      %152 = sbr.rel (%p150) target = $region28
    $region27: #{tpu_custom_call.1} parent=5 // pred_region
      // Predicated region
      $region29: #{tpu_custom_call.1} parent=27 // pred_check
        %p153 = pneg %p30
      $region30: #{tpu_custom_call.1} parent=27 // pred_check_branch
        %155 = sbr.rel (%p153) target = $region32
      $region31: #{tpu_custom_call.1} parent=27 // pred_region
        %s156 = smul.u32 4, %s10
        %p157 = scmp.lt.s32.totalorder %s156, 7
        %s158 = scalar_select %p157, %s156, 7
        %s159 = smul.addr %s158, 8
        %s160 = scalar_lea.vmem %s0, %s159
        %s161 = smul.u32 4, %s10
      $region32: #{tpu_custom_call.1} parent=27 // pred_fallthru
        _
    $region28: #{tpu_custom_call.1} parent=5 // pred_fallthru
      _
    %p162 = scmp.le.s32.totalorder 1, %s10
    %p163 = scmp.lt.s32.totalorder %s10, 3
    %p164 = pnand %p162, %p163
    %p165 = pneg %p164
    // Predicated region
    $region33: #{tpu_custom_call.1} parent=5 // pred_check
      _
    $region34: #{tpu_custom_call.1} parent=5 // pred_check_branch
      %167 = sbr.rel (%p164) target = $region36
    $region35: #{tpu_custom_call.1} parent=5 // pred_region
      %s168 = ssub.s32 %s10, 1
      %s169 = smul.u32 4, %s15
      %p170 = scmp.lt.s32.totalorder %s169, 7
      %s171 = scalar_select %p170, %s169, 7
      %s172 = smul.addr %s171, 8
      %s173 = scalar_lea.vmem %s0, %s172
      %p174 = pneg %p36
      %p175 = pneg %p33
      %p176 = pneg %p57
      %p177 = pneg %p54
      %p178 = pneg %p78
      %p179 = pneg %p75
      %p180 = pneg %p99
      %p181 = pneg %p96
      %p182 = pneg %p125
      %p183 = pneg %p122
      %s184 = smul.u32 4, %s15
      %p185 = scmp.lt.s32.totalorder %s184, 7
      %s186 = scalar_select %p185, %s184, 7
      %s187 = smul.addr %s186, 8
      %s188 = scalar_lea.vmem %s4, %s187
      %s189 = smul.u32 4, %s15
      %p190 = scmp.lt.s32.totalorder %s189, 7
      %s191 = scalar_select %p190, %s189, 7
      %s192 = smul.addr %s191, 8
      %s193 = scalar_lea.vmem %s0, %s192
      %s194 = smul.u32 4, %s15
      %s195 = smul.u32 4, %s15
      %p196 = scmp.lt.s32.totalorder %s195, 7
      %s197 = scalar_select %p196, %s195, 7
      %s198 = smul.addr %s197, 8
      %s199 = scalar_lea.vmem %s4, %s198
      %s200 = smul.u32 4, %s15
      %v202 = vld [vmem:[%s193] sm:$0xff]
      %v203 = vld [vmem:[%s193 + $0x8] sm:$0xff]
      %v204 = vld [vmem:[%s193 + $0x10] sm:$0xff]
      %v205 = vld [vmem:[%s193 + $0x18] sm:$0xff]
      %v206 = vpack.c.bf16 %v203, %v202
      %v207 = vpack.c.bf16 %v205, %v204
      %v208 = vld [vmem:[%s2] sm:$0xf]
      %v209 = vld [vmem:[%s2 + $0x4] sm:$0xf]
      %v210 = vld [vmem:[%s2 + $0x8] sm:$0xf]
      %v211 = vld [vmem:[%s2 + $0xc] sm:$0xf]
      %v212 = vld [vmem:[%s1] sm:$0xff]
      %v213 = vld [vmem:[%s1 + $0x8] sm:$0xff]
      %v214 = vld [vmem:[%s1 + $0x10] sm:$0xff]
      %v215 = vld [vmem:[%s1 + $0x18] sm:$0xff]
      %v220 = vunpack.c.l.b16 %v208
      %v221 = vunpack.c.l.b16 %v209
      %v222 = vunpack.c.l.b16 %v210
      %v223 = vunpack.c.l.b16 %v211
      %v224 = vpack.c.b16 %v221, %v220
      %v225 = vpack.c.b16 %v223, %v222
      %vm228 = vcmask 261120
      %v230 = vsel %vm228, %v206, 0
      %v233 = vsel %vm228, %v207, 0
      %235 = vmatpush.bf16.msra.mxu0 0
      %236 = vmatpush.bf16.msra.mxu0 0
      %237 = vmatpush.bf16.msra.mxu0 0
      %238 = vmatpush.bf16.msra.mxu0 0
      %239 = vmatpush.bf16.msra.mxu0 0
      %240 = vmatpush.bf16.msra.mxu0 0
      %241 = vmatpush.bf16.msra.mxu0 %v225
      %242 = vmatpush.bf16.msra.mxu0 %v224
      %243 = vmatmul.bf16.gmra.mxu0 %v230
      %v244 = vpop.f32.mrf.mxu0
      %v245 = vadd.f32 %v212, %v244
      %v246 = vpop.f32.mrf.mxu0
      %v247 = vadd.f32 %v213, %v246
      %248 = vmatmul.bf16.gmra.mxu0 %v233
      %v249 = vpop.f32.mrf.mxu0
      %v250 = vadd.f32 %v214, %v249
      %v251 = vpop.f32.mrf.mxu0
      %v252 = vadd.f32 %v215, %v251
      %253 = vdwg.mxu0
      %v254 = vtanh.pop %v245
      %v255 = vtanh.pop %v247
      %v256 = vtanh.pop %v250
      %v257 = vtanh.pop %v252
      %v258 = vld [vmem:[%s3] sm:$0x1]
      %v260 = vperm.slane %v258, 0
      %v262 = vmul.f32 %v254, %v260
      %v263 = vmul.f32 %v255, %v260
      %v264 = vmul.f32 %v256, %v260
      %v265 = vmul.f32 %v257, %v260
      %v266 = vsel %vm228, %v262, 0.0
      %267 = vadd.xlane.f32.xlu0 %v266
      %v268 = vpop.xlane.xlu0 %267
      %v269 = vsel %vm228, %v263, 0.0
      %270 = vadd.xlane.f32.xlu0 %v269
      %v271 = vpop.xlane.xlu0 %270
      %v272 = vsel %vm228, %v264, 0.0
      %273 = vadd.xlane.f32.xlu0 %v272
      %v274 = vpop.xlane.xlu0 %273
      %v275 = vsel %vm228, %v265, 0.0
      %276 = vadd.xlane.f32.xlu0 %v275
      %v277 = vpop.xlane.xlu0 %276
      %vm278 = vcmask 7168
      %279 = vst.msk [vmem:[%s199] sm:$0xff] %vm278, %v268
      %280 = vst.msk [vmem:[%s199 + $0x8] sm:$0xff] %vm278, %v271
      %281 = vst.msk [vmem:[%s199 + $0x10] sm:$0xff] %vm278, %v274
      %282 = vst.msk [vmem:[%s199 + $0x18] sm:$0xff] %vm278, %v277
      %s283 = smul.u32 4, %s15
      %p284 = scmp.lt.s32.totalorder %s283, 7
      %s285 = scalar_select %p284, %s283, 7
      %s286 = smul.addr %s285, 8
      %s287 = scalar_lea.vmem %s4, %s286
      // Predicated region
      $region37: #{tpu_custom_call.1} parent=35 // pred_check
        %p288 = pneg %p122
      $region38: #{tpu_custom_call.1} parent=35 // pred_check_branch
        %290 = sbr.rel (%p288) target = $region40
      $region39: #{tpu_custom_call.1} parent=35 // pred_region
        %s291 = smul.u32 4, %s15
      $region40: #{tpu_custom_call.1} parent=35 // pred_fallthru
        _
    $region36: #{tpu_custom_call.1} parent=5 // pred_fallthru
      _
    %p292 = scmp.le.s32.totalorder 2, %s10
    // Predicated region
    $region41: #{tpu_custom_call.1} parent=5 // pred_check
      %p293 = pneg %p292
    $region42: #{tpu_custom_call.1} parent=5 // pred_check_branch
      %295 = sbr.rel (%p293) target = $region44
    $region43: #{tpu_custom_call.1} parent=5 // pred_region
      %s296 = ssub.s32 %s10, 2
      // Predicated region
      $region45: #{tpu_custom_call.1} parent=43 // pred_check
        %p297 = pneg %p128
      $region46: #{tpu_custom_call.1} parent=43 // pred_check_branch
        %299 = sbr.rel (%p297) target = $region48
      $region47: #{tpu_custom_call.1} parent=43 // pred_region
        %s300 = smul.u32 4, %s16
        %p301 = scmp.lt.s32.totalorder %s300, 7
        %s302 = scalar_select %p301, %s300, 7
        %s303 = smul.addr %s302, 8
        %s304 = scalar_lea.vmem %s4, %s303
      $region48: #{tpu_custom_call.1} parent=43 // pred_fallthru
        _
    $region44: #{tpu_custom_call.1} parent=5 // pred_fallthru
      _
  $region6: #{tpu_custom_call.1} parent=0 // loop_footer
    %s14 = sadd.s32 1, %s10
  $region7: #{tpu_custom_call.1} parent=0 // loop_footer_branch
    %9 = sbr.rel target = $region3
  $region8: #{tpu_custom_call.1} parent=0 // loop_exit
    _

</llo_original>
